<compile_context>
chip_gen: v7x
topology: tpu7x:2x2x1
jax: 0.10.0
libtpu: 0.0.40
codegen_flags: <defaults>
</compile_context>

<pallas_src>
import jax
import jax.numpy as jnp
from jax import lax
from jax.experimental import pallas as pl
from jax.experimental.pallas import tpu as pltpu


# ----------------------------------------------------------------------------
# Kernel A: conv1 as im2col matmul, fused bias + ReLU (MXU).
# ----------------------------------------------------------------------------
def _conv_matmul_kernel(p_ref, w_ref, b_ref, o_ref):
    # p_ref: (tm, Kp)   im2col patches (contraction dim zero-padded to 128x)
    # w_ref: (Kp, Cout) conv weights as a matrix
    # b_ref: (1, Cout)  bias
    # o_ref: (tm, Cout) relu(p @ w + b)
    acc = jnp.dot(p_ref[...], w_ref[...], preferred_element_type=jnp.float32)
    acc = acc + b_ref[...]
    o_ref[...] = jnp.maximum(acc, 0.0).astype(o_ref.dtype)


def _conv_relu(patches, w_mat, bias):
    M, Kp = patches.shape
    _, cout = w_mat.shape
    tm = 64 if M % 64 == 0 else M  # row-tile (multiple of 8 sublanes)
    return pl.pallas_call(
        _conv_matmul_kernel,
        out_shape=jax.ShapeDtypeStruct((M, cout), patches.dtype),
        grid=(M // tm,),
        in_specs=[
            pl.BlockSpec((tm, Kp), lambda i: (i, 0)),
            pl.BlockSpec((Kp, cout), lambda i: (0, 0)),
            pl.BlockSpec((1, cout), lambda i: (0, 0)),
        ],
        out_specs=pl.BlockSpec((tm, cout), lambda i: (i, 0)),
        compiler_params=pltpu.CompilerParams(
            dimension_semantics=("parallel",)),
    )(patches, w_mat, bias)


# ----------------------------------------------------------------------------
# Kernel B: fused MaxPool2d(2,2) + Flatten + Linear(.., 128) + ReLU.
# The four pool phases arrive already laid out in the torch NCHW flatten order
# (a free reshape in the wrapper), so the elementwise max IS the max-pool and
# its result feeds the MXU matmul directly — the flatten never materializes.
# ----------------------------------------------------------------------------
def _pool_flatten_linear_kernel(a00_ref, a01_ref, a10_ref, a11_ref,
                                w_ref, b_ref, o_ref):
    h = jnp.maximum(jnp.maximum(a00_ref[...], a01_ref[...]),
                    jnp.maximum(a10_ref[...], a11_ref[...]))   # (N, D) pooled+flat
    acc = jnp.dot(h, w_ref[...], preferred_element_type=jnp.float32)
    acc = acc + b_ref[...]
    o_ref[...] = jnp.maximum(acc, 0.0).astype(o_ref.dtype)


def _pool_flatten_linear_relu(a00, a01, a10, a11, w_t, bias):
    n, d = a00.shape
    _, h = w_t.shape
    spec_a = pl.BlockSpec((n, d), lambda i: (0, 0))
    return pl.pallas_call(
        _pool_flatten_linear_kernel,
        out_shape=jax.ShapeDtypeStruct((n, h), a00.dtype),
        grid=(1,),
        in_specs=[spec_a, spec_a, spec_a, spec_a,
                  pl.BlockSpec((d, h), lambda i: (0, 0)),
                  pl.BlockSpec((1, h), lambda i: (0, 0))],
        out_specs=pl.BlockSpec((n, h), lambda i: (0, 0)),
        compiler_params=pltpu.CompilerParams(
            dimension_semantics=("arbitrary",)),
    )(a00, a01, a10, a11, w_t, bias)


# ----------------------------------------------------------------------------
# Kernel C: BayesLinear (deterministic forward) + output activation.
# ----------------------------------------------------------------------------
def _make_dense_head_kernel(activation):
    def kernel(x_ref, w_ref, b_ref, o_ref):
        logits = jnp.dot(x_ref[...], w_ref[...],
                         preferred_element_type=jnp.float32) + b_ref[...]
        if activation == "softmax":
            m = jnp.max(logits, axis=-1, keepdims=True)
            e = jnp.exp(logits - m)
            out = e / jnp.sum(e, axis=-1, keepdims=True)
        else:  # sigmoid (binary head: num_class in [None, 2])
            out = 1.0 / (1.0 + jnp.exp(-logits))
        o_ref[...] = out.astype(o_ref.dtype)
    return kernel


def _dense_head(x, w_t, bias, activation):
    n, k = x.shape
    _, c = w_t.shape
    return pl.pallas_call(
        _make_dense_head_kernel(activation),
        out_shape=jax.ShapeDtypeStruct((n, c), x.dtype),
        grid=(1,),
        in_specs=[pl.BlockSpec((n, k), lambda i: (0, 0)),
                  pl.BlockSpec((k, c), lambda i: (0, 0)),
                  pl.BlockSpec((1, c), lambda i: (0, 0))],
        out_specs=pl.BlockSpec((n, c), lambda i: (0, 0)),
        compiler_params=pltpu.CompilerParams(
            dimension_semantics=("arbitrary",)),
    )(x, w_t, bias)


# ----------------------------------------------------------------------------
# Full forward
# ----------------------------------------------------------------------------
def bnn_forward(x, params):
    """Pallas equivalent of BNN.forward(inputs, sample=False)."""
    wc, bc = params["conv_w"], params["conv_b"]
    w1, b1 = params["lin1_w"], params["lin1_b"]
    wd, bd = params["dense_w"], params["dense_b"]

    n, cin, h, w = x.shape
    cout = wc.shape[0]
    ho, wo = h // 2, w // 2        # conv1: k=3, s=2, p=1
    hp, wp = ho // 2, wo // 2      # maxpool 2x2

    # --- im2col for conv1 (layout plumbing only; conv math is the MXU matmul
    # inside _conv_matmul_kernel) ---
    xp = jnp.pad(x, ((0, 0), (0, 0), (1, 1), (1, 1)))
    cols = []
    for kh in range(3):
        for kw in range(3):
            cols.append(xp[:, :, kh:kh + 2 * ho:2, kw:kw + 2 * wo:2])
    pat = jnp.stack(cols, axis=2)                              # (N, Cin, 9, Ho, Wo)
    pat = pat.transpose(0, 3, 4, 1, 2).reshape(n * ho * wo, cin * 9)
    w_mat = wc.reshape(cout, cin * 9).T                        # (Cin*9, Cout)
    k = cin * 9
    kp = ((k + 127) // 128) * 128                              # lane-friendly pad
    pat = jnp.pad(pat, ((0, 0), (0, kp - k)))
    w_mat = jnp.pad(w_mat, ((0, kp - k), (0, 0)))

    conv = _conv_relu(pat, w_mat, bc.reshape(1, cout))         # (N*Ho*Wo, Cout)

    # --- present the conv output as NCHW; each 2x2 pool phase is reshaped
    # (zero-cost view) into the torch `input.view(N, -1)` NCHW flatten order.
    # Flatten is therefore free; pool max + linear1 + ReLU are fused in one
    # Pallas kernel fed by lane-dense (N, C*Hp*Wp) slabs. ---
    a = conv.reshape(n, ho, wo, cout).transpose(0, 3, 1, 2)    # (N, Cout, Ho, Wo)
    d_flat = cout * hp * wp
    a00 = a[:, :, 0::2, 0::2].reshape(n, d_flat)
    a01 = a[:, :, 0::2, 1::2].reshape(n, d_flat)
    a10 = a[:, :, 1::2, 0::2].reshape(n, d_flat)
    a11 = a[:, :, 1::2, 1::2].reshape(n, d_flat)

    hidden = _pool_flatten_linear_relu(a00, a01, a10, a11,
                                       w1.T, b1.reshape(1, -1))   # (N, 128)

    num_class = wd.shape[0]
    activation = "sigmoid" if num_class == 1 else "softmax"
    return _dense_head(hidden, wd.T, bd.reshape(1, -1), activation)


# ----------------------------------------------------------------------------
# Pure-JAX reference (mirrors the torch module math)
# ----------------------------------------------------------------------------
def bnn_reference(x, params):
    wc, bc = params["conv_w"], params["conv_b"]
    w1, b1 = params["lin1_w"], params["lin1_b"]
    wd, bd = params["dense_w"], params["dense_b"]
    conv = lax.conv_general_dilated(
        x, wc, window_strides=(2, 2), padding=((1, 1), (1, 1)),
        dimension_numbers=("NCHW", "OIHW", "NCHW"))
    conv = jax.nn.relu(conv + bc.reshape(1, -1, 1, 1))
    pooled = lax.reduce_window(conv, -jnp.inf, lax.max,
                               (1, 1, 2, 2), (1, 1, 2, 2), "VALID")
    f = pooled.reshape(x.shape[0], -1)           # torch Flatten: view(N, -1)
    h = jax.nn.relu(f @ w1.T + b1)
    logits = h @ wd.T + bd
    if wd.shape[0] == 1:
        return jax.nn.sigmoid(logits)
    return jax.nn.softmax(logits, axis=1)


if __name__ == "__main__":
    key = jax.random.PRNGKey(0)
    n, cin, in_size, num_class = 2, 3, 16, 10
    cout = 32
    map_size = in_size // 4
    d_flat = cout * map_size * map_size          # 512
    hidden = 128

    ks = jax.random.split(key, 7)
    x = jax.random.normal(ks[0], (n, cin, in_size, in_size), dtype=jnp.float32)
    params = {
        "conv_w": jax.random.normal(ks[1], (cout, cin, 3, 3), jnp.float32)
                  * jnp.sqrt(2.0 / (3 * 3 * cout)),
        "conv_b": jax.random.normal(ks[2], (cout,), jnp.float32) * 0.1,
        "lin1_w": jax.random.normal(ks[3], (hidden, d_flat), jnp.float32) * 0.01,
        "lin1_b": jax.random.normal(ks[4], (hidden,), jnp.float32) * 0.1,
        "dense_w": jax.random.normal(ks[5], (num_class, hidden), jnp.float32) * 0.01,
        "dense_b": jax.random.normal(ks[6], (num_class,), jnp.float32) * 0.1,
    }

    out = bnn_forward(x, params)
    jax.block_until_ready(out)

    ref = bnn_reference(x, params)
    assert out.shape == (n, num_class), out.shape
    assert out.dtype == x.dtype
    assert jnp.allclose(out, ref, atol=1e-4, rtol=1e-4), (
        float(jnp.max(jnp.abs(out - ref))))
    assert jnp.allclose(jnp.sum(out, axis=1), 1.0, atol=1e-4)

    print("KERNEL_OK")
</pallas_src>

<mosaic_0001>
module attributes {stable_mosaic.version = 11 : i64} {
  func.func @_conv_matmul_kernel(%arg0: i32, %arg1: memref<64x128xf32, #tpu.memory_space<vmem>>, %arg2: memref<128x32xf32, #tpu.memory_space<vmem>>, %arg3: memref<1x32xf32, #tpu.memory_space<vmem>>, %arg4: memref<64x32xf32, #tpu.memory_space<vmem>>) attributes {dimension_semantics = [#tpu.dimension_semantics<parallel>], iteration_bounds = array<i64: 2>, scalar_prefetch = 0 : i64, scratch_operands = 0 : i64, tpu.core_type = #tpu.core_type<tc>, window_params = [{transform_indices = @transform_0, window_bounds = array<i64: 64, 128>}, {pipeline_mode = #tpu.pipeline_mode<synchronous>, transform_indices = @transform_1, window_bounds = array<i64: 128, 32>}, {pipeline_mode = #tpu.pipeline_mode<synchronous>, transform_indices = @transform_2, window_bounds = array<i64: 1, 32>}, {transform_indices = @transform_3, window_bounds = array<i64: 64, 32>}]} {
    %c0 = arith.constant 0 : index
    %c0_0 = arith.constant 0 : index
    %0 = vector.load %arg1[%c0, %c0_0] : memref<64x128xf32, #tpu.memory_space<vmem>>, vector<64x128xf32>
    %c0_1 = arith.constant 0 : index
    %c0_2 = arith.constant 0 : index
    %1 = vector.load %arg2[%c0_1, %c0_2] : memref<128x32xf32, #tpu.memory_space<vmem>>, vector<128x32xf32>
    %cst = arith.constant dense<0.000000e+00> : vector<64x32xf32>
    %2 = tpu.matmul %0, %1, %cst {dimension_numbers = #tpu.dot_dimension_numbers<[1], [0], [0], [1], [0, 0, 1, 1], [], []>} : vector<64x128xf32>, vector<128x32xf32>, vector<64x32xf32> -> vector<64x32xf32>
    %c0_3 = arith.constant 0 : index
    %c0_4 = arith.constant 0 : index
    %3 = vector.load %arg3[%c0_3, %c0_4] : memref<1x32xf32, #tpu.memory_space<vmem>>, vector<1x32xf32>
    %4 = vector.broadcast %3 : vector<1x32xf32> to vector<64x32xf32>
    %5 = arith.addf %2, %4 : vector<64x32xf32>
    %cst_5 = arith.constant 0.000000e+00 : f32
    %6 = vector.broadcast %cst_5 : f32 to vector<64x32xf32>
    %7 = arith.maximumf %5, %6 : vector<64x32xf32>
    %c0_6 = arith.constant 0 : index
    %c0_7 = arith.constant 0 : index
    %8 = vector.load %arg4[%c0_6, %c0_7] : memref<64x32xf32, #tpu.memory_space<vmem>>, vector<64x32xf32>
    tpu.vector_store %arg4[%c0_6, %c0_7], %7 {strides = array<i32>} : memref<64x32xf32, #tpu.memory_space<vmem>>, vector<64x32xf32>,
    return
  }
  func.func @transform_0(%arg0: i32) -> (i32, i32) {
    %c0_i32 = arith.constant 0 : i32
    %c0_i32_0 = arith.constant 0 : i32
    return %arg0, %c0_i32 : i32, i32
  }
  func.func @transform_1(%arg0: i32) -> (i32, i32) {
    %c0_i32 = arith.constant 0 : i32
    %c0_i32_0 = arith.constant 0 : i32
    %c0_i32_1 = arith.constant 0 : i32
    return %c0_i32, %c0_i32_0 : i32, i32
  }
  func.func @transform_2(%arg0: i32) -> (i32, i32) {
    %c0_i32 = arith.constant 0 : i32
    %c0_i32_0 = arith.constant 0 : i32
    %c0_i32_1 = arith.constant 0 : i32
    return %c0_i32, %c0_i32_0 : i32, i32
  }
  func.func @transform_3(%arg0: i32) -> (i32, i32) {
    %c0_i32 = arith.constant 0 : i32
    %c0_i32_0 = arith.constant 0 : i32
    return %arg0, %c0_i32 : i32, i32
  }
}

</mosaic_0001>

<llo_original>
// kernel: tpu_custom_call.1
$region0: #{tpu_custom_call.1}
  #allocation0 [shape = 'u32[]', space=smem, size = 0x4, offset = 0x4, fixed_abs, tag = 'smem constant byte address 0x4 - core index']
  #allocation1 [shape = 'u32[144,128]{1,0:T(1,128)}', space=vmem, size = 0x12000, scoped, tag = 'internal scratch']
  %s0 = inlined_call_operand.vmem [shape: f32[128,128], index: 0, kind: input, shape index: {}]
  %s1 = inlined_call_operand.vmem [shape: f32[128,32], index: 1, kind: input, shape index: {}]
  %s2 = inlined_call_operand.vmem [shape: f32[1,32], index: 2, kind: input, shape index: {}]
  %s3 = inlined_call_operand.vmem [shape: f32[128,32], index: 3, kind: output, shape index: {}]
  %s4 = sld [smem:[#allocation0]]
  $region45: #{tpu_custom_call.1} parent=0
    _
  %s6 = ssub.s32 1, %s4
  %s7 = scalar_select 0, %s6, %s4
  loop: start=0, step=1, limit=4
  $region2: #{tpu_custom_call.1} parent=0 // loop_pre_header
    _
  $region3: #{tpu_custom_call.1} parent=0 // loop_header
    %s9 = sphi 0, %s13
    %p10 = scmp.ge.s32.totalorder %s9, 4
    %s19 = sphi 0, %s21
    %s22 = sphi 0, %s19
    %s23 = sphi 0, %s22
    %s39 = sphi 0, %s23
    %s43 = sphi 0, %s43
    %s45 = sphi 0, %s43
    %s46 = sphi 0, %s45
    %s60 = sphi 0, %s46
    %s64 = sphi 0, %s64
    %s66 = sphi 0, %s64
    %s67 = sphi 0, %s66
    %s81 = sphi 0, %s67
    %s87 = sphi 0, %s89
    %s90 = sphi 0, %s87
    %s91 = sphi 0, %s90
    %s107 = sphi 0, %s91
  $region4: #{tpu_custom_call.1} parent=0 // loop_header_branch
    %12 = sbr.rel (%p10) target = $region8
  $region5: #{tpu_custom_call.1} parent=0 // loop_body
    %s14 = ssub.s32 %s9, 1
    %s15 = ssub.s32 %s9, 2
    %s16 = sadd.s32 %s9, 1
    %s17 = ssub.s32 %s9, %s16
    %p18 = scmp.eq.s32.totalorder %s17, 0
    %s20 = sadd.s32 %s19, 1
    %s21 = scalar_select %p18, %s19, %s20
    %p24 = pneg %p18
    %p25 = scmp.eq.s32.totalorder %s9, 1
    %p26 = por %p24, %p25
    %p27 = scmp.ne.s32.totalorder %s19, %s22
    %p28 = scmp.eq.s32.totalorder %s9, 0
    %p29 = por %p27, %p28
    %p30 = scmp.ne.s32.totalorder %s19, %s22
    %p31 = scmp.eq.s32.totalorder %s14, 1
    %p32 = por %p30, %p31
    %p33 = scmp.ne.s32.totalorder %s22, %s23
    %p34 = scmp.eq.s32.totalorder %s14, 0
    %p35 = por %p33, %p34
    %p36 = scmp.ne.s32.totalorder %s22, %s23
    %p37 = scmp.eq.s32.totalorder %s15, 1
    %p38 = por %p36, %p37
    %p40 = scmp.ne.s32.totalorder %s23, %s39
    %p41 = scmp.eq.s32.totalorder %s15, 0
    %p42 = por %p40, %p41
    %s44 = sadd.s32 %s43, 1
    %p47 = scmp.eq.s32.totalorder %s9, 1
    %p48 = scmp.ne.s32.totalorder %s43, %s45
    %p49 = scmp.eq.s32.totalorder %s9, 0
    %p50 = por %p48, %p49
    %p51 = scmp.ne.s32.totalorder %s43, %s45
    %p52 = scmp.eq.s32.totalorder %s14, 1
    %p53 = por %p51, %p52
    %p54 = scmp.ne.s32.totalorder %s45, %s46
    %p55 = scmp.eq.s32.totalorder %s14, 0
    %p56 = por %p54, %p55
    %p57 = scmp.ne.s32.totalorder %s45, %s46
    %p58 = scmp.eq.s32.totalorder %s15, 1
    %p59 = por %p57, %p58
    %p61 = scmp.ne.s32.totalorder %s46, %s60
    %p62 = scmp.eq.s32.totalorder %s15, 0
    %p63 = por %p61, %p62
    %s65 = sadd.s32 %s64, 1
    %p68 = scmp.eq.s32.totalorder %s9, 1
    %p69 = scmp.ne.s32.totalorder %s64, %s66
    %p70 = scmp.eq.s32.totalorder %s9, 0
    %p71 = por %p69, %p70
    %p72 = scmp.ne.s32.totalorder %s64, %s66
    %p73 = scmp.eq.s32.totalorder %s14, 1
    %p74 = por %p72, %p73
    %p75 = scmp.ne.s32.totalorder %s66, %s67
    %p76 = scmp.eq.s32.totalorder %s14, 0
    %p77 = por %p75, %p76
    %p78 = scmp.ne.s32.totalorder %s66, %s67
    %p79 = scmp.eq.s32.totalorder %s15, 1
    %p80 = por %p78, %p79
    %p82 = scmp.ne.s32.totalorder %s67, %s81
    %p83 = scmp.eq.s32.totalorder %s15, 0
    %p84 = por %p82, %p83
    %s85 = ssub.s32 %s9, %s16
    %p86 = scmp.eq.s32.totalorder %s85, 0
    %s88 = sadd.s32 %s87, 1
    %s89 = scalar_select %p86, %s87, %s88
    %p92 = pneg %p86
    %p93 = scmp.eq.s32.totalorder %s9, 1
    %p94 = por %p92, %p93
    %p95 = scmp.ne.s32.totalorder %s87, %s90
    %p96 = scmp.eq.s32.totalorder %s9, 0
    %p97 = por %p95, %p96
    %p98 = scmp.ne.s32.totalorder %s87, %s90
    %p99 = scmp.eq.s32.totalorder %s14, 1
    %p100 = por %p98, %p99
    %p101 = scmp.ne.s32.totalorder %s90, %s91
    %p102 = scmp.eq.s32.totalorder %s14, 0
    %p103 = por %p101, %p102
    %p104 = scmp.ne.s32.totalorder %s90, %s91
    %p105 = scmp.eq.s32.totalorder %s15, 1
    %p106 = por %p104, %p105
    %p108 = scmp.ne.s32.totalorder %s91, %s107
    %p109 = scmp.eq.s32.totalorder %s15, 0
    %p110 = por %p108, %p109
    %p111 = scmp.le.s32.totalorder 1, %s9
    %p112 = scmp.lt.s32.totalorder %s9, 3
    %p113 = pnand %p111, %p112
    %p114 = pneg %p113
    // Predicated region
    $region9: #{tpu_custom_call.1} parent=5 // pred_check
      _
    $region10: #{tpu_custom_call.1} parent=5 // pred_check_branch
      %116 = sbr.rel (%p113) target = $region12
    $region11: #{tpu_custom_call.1} parent=5 // pred_region
      %s117 = ssub.s32 %s9, 1
      // Predicated region
      $region13: #{tpu_custom_call.1} parent=11 // pred_check
        %p118 = pneg %p56
      $region14: #{tpu_custom_call.1} parent=11 // pred_check_branch
        %120 = sbr.rel (%p118) target = $region16
      $region15: #{tpu_custom_call.1} parent=11 // pred_region
        _
      $region16: #{tpu_custom_call.1} parent=11 // pred_fallthru
        _
      // Predicated region
      $region17: #{tpu_custom_call.1} parent=11 // pred_check
        %p121 = pneg %p77
      $region18: #{tpu_custom_call.1} parent=11 // pred_check_branch
        %123 = sbr.rel (%p121) target = $region20
      $region19: #{tpu_custom_call.1} parent=11 // pred_region
        _
      $region20: #{tpu_custom_call.1} parent=11 // pred_fallthru
        _
    $region12: #{tpu_custom_call.1} parent=5 // pred_fallthru
      _
    %p124 = scmp.lt.s32.totalorder %s9, 2
    // Predicated region
    $region21: #{tpu_custom_call.1} parent=5 // pred_check
      %p125 = pneg %p124
    $region22: #{tpu_custom_call.1} parent=5 // pred_check_branch
      %127 = sbr.rel (%p125) target = $region24
    $region23: #{tpu_custom_call.1} parent=5 // pred_region
      // Predicated region
      $region25: #{tpu_custom_call.1} parent=23 // pred_check
        %p128 = pneg %p29
      $region26: #{tpu_custom_call.1} parent=23 // pred_check_branch
        %130 = sbr.rel (%p128) target = $region28
      $region27: #{tpu_custom_call.1} parent=23 // pred_region
        %s131 = smul.u32 8, %s9
        %p132 = scmp.lt.s32.totalorder %s131, 15
        %s133 = scalar_select %p132, %s131, 15
        %s134 = smul.addr %s133, 8
        %s135 = scalar_lea.vmem %s0, %s134
        %s136 = smul.u32 8, %s9
      $region28: #{tpu_custom_call.1} parent=23 // pred_fallthru
        _
    $region24: #{tpu_custom_call.1} parent=5 // pred_fallthru
      _
    %p137 = scmp.le.s32.totalorder 1, %s9
    %p138 = scmp.lt.s32.totalorder %s9, 3
    %p139 = pnand %p137, %p138
    %p140 = pneg %p139
    // Predicated region
    $region29: #{tpu_custom_call.1} parent=5 // pred_check
      _
    $region30: #{tpu_custom_call.1} parent=5 // pred_check_branch
      %142 = sbr.rel (%p139) target = $region32
    $region31: #{tpu_custom_call.1} parent=5 // pred_region
      %s143 = ssub.s32 %s9, 1
      %s144 = smul.u32 8, %s14
      %p145 = scmp.lt.s32.totalorder %s144, 15
      %s146 = scalar_select %p145, %s144, 15
      %s147 = smul.addr %s146, 8
      %s148 = scalar_lea.vmem %s0, %s147
      %p149 = pneg %p35
      %p150 = pneg %p32
      %p151 = pneg %p56
      %p152 = pneg %p53
      %p153 = pneg %p77
      %p154 = pneg %p74
      %p155 = pneg %p103
      %p156 = pneg %p100
      %s157 = smul.u32 8, %s14
      %p158 = scmp.lt.s32.totalorder %s157, 15
      %s159 = scalar_select %p158, %s157, 15
      %s160 = smul.addr %s159, 8
      %s161 = scalar_lea.vmem %s3, %s160
      %s162 = smul.u32 8, %s14
      %p163 = scmp.lt.s32.totalorder %s162, 15
      %s164 = scalar_select %p163, %s162, 15
      %s165 = smul.addr %s164, 8
      %s166 = scalar_lea.vmem %s0, %s165
      %s167 = smul.u32 8, %s14
      %s168 = smul.u32 8, %s14
      %p169 = scmp.lt.s32.totalorder %s168, 15
      %s170 = scalar_select %p169, %s168, 15
      %s171 = smul.addr %s170, 8
      %s172 = scalar_lea.vmem %s3, %s171
      %s173 = smul.u32 8, %s14
      %v174 = vld [vmem:[%s166] sm:$0xff]
      %v175 = vld [vmem:[%s166 + $0x8] sm:$0xff]
      %v176 = vld [vmem:[%s166 + $0x10] sm:$0xff]
      %v177 = vld [vmem:[%s166 + $0x18] sm:$0xff]
      %v178 = vld [vmem:[%s166 + $0x20] sm:$0xff]
      %v179 = vld [vmem:[%s166 + $0x28] sm:$0xff]
      %v180 = vld [vmem:[%s166 + $0x30] sm:$0xff]
      %v181 = vld [vmem:[%s166 + $0x38] sm:$0xff]
      %v182 = vld [vmem:[%s1] sm:$0xff]
      %v183 = vld [vmem:[%s1 + $0x8] sm:$0xff]
      %v184 = vld [vmem:[%s1 + $0x10] sm:$0xff]
      %v185 = vld [vmem:[%s1 + $0x18] sm:$0xff]
      %v186 = vld [vmem:[%s1 + $0x20] sm:$0xff]
      %v187 = vld [vmem:[%s1 + $0x28] sm:$0xff]
      %v188 = vld [vmem:[%s1 + $0x30] sm:$0xff]
      %v189 = vld [vmem:[%s1 + $0x38] sm:$0xff]
      %v190 = vld [vmem:[%s1 + $0x40] sm:$0xff]
      %v191 = vld [vmem:[%s1 + $0x48] sm:$0xff]
      %v192 = vld [vmem:[%s1 + $0x50] sm:$0xff]
      %v193 = vld [vmem:[%s1 + $0x58] sm:$0xff]
      %v194 = vld [vmem:[%s1 + $0x60] sm:$0xff]
      %v195 = vld [vmem:[%s1 + $0x68] sm:$0xff]
      %v196 = vld [vmem:[%s1 + $0x70] sm:$0xff]
      %v197 = vld [vmem:[%s1 + $0x78] sm:$0xff]
      %v198 = vld [vmem:[%s2] sm:$0x1]
      %v200 = vlaneseq
      %v201 = vshrl.u32 %v200, 7
      %v202 = vsub.s32 0, %v201
      %v203 = vrot.slane %v198, %v202
      %205 = vmatprep.subr.mxu0 0.0
      %206 = vmatpush1.msra.mxu0 %v182
      %207 = vmatprep.subr.mxu0 0.0
      %208 = vmatpush1.msra.mxu0 %v183
      %209 = vmatprep.subr.mxu0 0.0
      %210 = vmatpush1.msra.mxu0 %v184
      %211 = vmatprep.subr.mxu0 0.0
      %212 = vmatpush1.msra.mxu0 %v185
      %213 = vmatprep.subr.mxu0 0.0
      %214 = vmatpush1.msra.mxu0 %v186
      %215 = vmatprep.subr.mxu0 0.0
      %216 = vmatpush1.msra.mxu0 %v187
      %217 = vmatprep.subr.mxu0 0.0
      %218 = vmatpush1.msra.mxu0 %v188
      %219 = vmatprep.subr.mxu0 0.0
      %220 = vmatpush1.msra.mxu0 %v189
      %221 = vmatprep.subr.mxu0 0.0
      %222 = vmatpush1.msra.mxu0 %v190
      %223 = vmatprep.subr.mxu0 0.0
      %224 = vmatpush1.msra.mxu0 %v191
      %225 = vmatprep.subr.mxu0 0.0
      %226 = vmatpush1.msra.mxu0 %v192
      %227 = vmatprep.subr.mxu0 0.0
      %228 = vmatpush1.msra.mxu0 %v193
      %229 = vmatprep.subr.mxu0 0.0
      %230 = vmatpush1.msra.mxu0 %v194
      %231 = vmatprep.subr.mxu0 0.0
      %232 = vmatpush1.msra.mxu0 %v195
      %233 = vmatprep.subr.mxu0 0.0
      %234 = vmatpush1.msra.mxu0 %v196
      %235 = vmatprep.subr.mxu0 0.0
      %236 = vmatpush1.msra.mxu0 %v197
      %237 = vmatprep.subr.mxu0 0.0
      %238 = vmatpush1.msra.mxu0 0.0
      %239 = vmatprep.subr.mxu0 0.0
      %240 = vmatpush1.msra.mxu0 0.0
      %241 = vmatprep.subr.mxu0 0.0
      %242 = vmatpush1.msra.mxu0 0.0
      %243 = vmatprep.subr.mxu0 0.0
      %244 = vmatpush1.msra.mxu0 0.0
      %245 = vmatprep.subr.mxu0 0.0
      %246 = vmatpush1.msra.mxu0 0.0
      %247 = vmatprep.subr.mxu0 0.0
      %248 = vmatpush1.msra.mxu0 0.0
      %249 = vmatprep.subr.mxu0 0.0
      %250 = vmatpush1.msra.mxu0 0.0
      %251 = vmatprep.subr.mxu0 0.0
      %252 = vmatpush1.msra.mxu0 0.0
      %253 = vmatprep.subr.mxu0 0.0
      %254 = vmatpush1.msra.mxu0 0.0
      %255 = vmatprep.subr.mxu0 0.0
      %256 = vmatpush1.msra.mxu0 0.0
      %257 = vmatprep.subr.mxu0 0.0
      %258 = vmatpush1.msra.mxu0 0.0
      %259 = vmatprep.subr.mxu0 0.0
      %260 = vmatpush1.msra.mxu0 0.0
      %261 = vmatprep.subr.mxu0 0.0
      %262 = vmatpush1.msra.mxu0 0.0
      %263 = vmatprep.subr.mxu0 0.0
      %264 = vmatpush1.msra.mxu0 0.0
      %265 = vmatprep.subr.mxu0 0.0
      %266 = vmatpush1.msra.mxu0 0.0
      %267 = vmatprep.subr.mxu0 0.0
      %268 = vmatpush1.msra.mxu0 0.0
      %269 = vmatprep.mubr.f32.mxu0 0.0
      %270 = vmatmul.mubr.f32.gmra.mrb[0].mxu0 %v174
      %v271 = vpop.f32.mrb[0].mxu0
      %v272 = vadd.f32 %v203, %v271
      %v273 = vpop.f32.mrb[0].mxu0
      %274 = vmatprep.mubr.f32.mxu0 0.0
      %275 = vmatmul.mubr.f32.gmra.mrb[0].mxu0 %v175
      %v276 = vpop.f32.mrb[0].mxu0
      %v277 = vadd.f32 %v203, %v276
      %v278 = vpop.f32.mrb[0].mxu0
      %279 = vmatprep.mubr.f32.mxu0 0.0
      %280 = vmatmul.mubr.f32.gmra.mrb[0].mxu0 %v176
      %v281 = vpop.f32.mrb[0].mxu0
      %v282 = vadd.f32 %v203, %v281
      %v283 = vpop.f32.mrb[0].mxu0
      %284 = vmatprep.mubr.f32.mxu0 0.0
      %285 = vmatmul.mubr.f32.gmra.mrb[0].mxu0 %v177
      %v286 = vpop.f32.mrb[0].mxu0
      %v287 = vadd.f32 %v203, %v286
      %v288 = vpop.f32.mrb[0].mxu0
      %289 = vmatprep.mubr.f32.mxu0 0.0
      %290 = vmatmul.mubr.f32.gmra.mrb[0].mxu0 %v178
      %v291 = vpop.f32.mrb[0].mxu0
      %v292 = vadd.f32 %v203, %v291
      %v293 = vpop.f32.mrb[0].mxu0
      %294 = vmatprep.mubr.f32.mxu0 0.0
      %295 = vmatmul.mubr.f32.gmra.mrb[0].mxu0 %v179
      %v296 = vpop.f32.mrb[0].mxu0
      %v297 = vadd.f32 %v203, %v296
      %v298 = vpop.f32.mrb[0].mxu0
      %299 = vmatprep.mubr.f32.mxu0 0.0
      %300 = vmatmul.mubr.f32.gmra.mrb[0].mxu0 %v180
      %v301 = vpop.f32.mrb[0].mxu0
      %v302 = vadd.f32 %v203, %v301
      %v303 = vpop.f32.mrb[0].mxu0
      %304 = vmatprep.mubr.f32.mxu0 0.0
      %305 = vmatmul.mubr.f32.gmra.mrb[0].mxu0 %v181
      %v306 = vpop.f32.mrb[0].mxu0
      %v307 = vadd.f32 %v203, %v306
      %v308 = vpop.f32.mrb[0].mxu0
      %309 = vdwg.mxu0
      %v310 = vmax.f32 %v272, 0.0
      %v311 = vmax.f32 %v277, 0.0
      %v312 = vmax.f32 %v282, 0.0
      %v313 = vmax.f32 %v287, 0.0
      %v314 = vmax.f32 %v292, 0.0
      %v315 = vmax.f32 %v297, 0.0
      %v316 = vmax.f32 %v302, 0.0
      %v317 = vmax.f32 %v307, 0.0
      %vm318 = vcmask 261120
      %319 = vst.msk [vmem:[%s172] sm:$0xff] %vm318, %v310
      %320 = vst.msk [vmem:[%s172 + $0x8] sm:$0xff] %vm318, %v311
      %321 = vst.msk [vmem:[%s172 + $0x10] sm:$0xff] %vm318, %v312
      %322 = vst.msk [vmem:[%s172 + $0x18] sm:$0xff] %vm318, %v313
      %323 = vst.msk [vmem:[%s172 + $0x20] sm:$0xff] %vm318, %v314
      %324 = vst.msk [vmem:[%s172 + $0x28] sm:$0xff] %vm318, %v315
      %325 = vst.msk [vmem:[%s172 + $0x30] sm:$0xff] %vm318, %v316
      %326 = vst.msk [vmem:[%s172 + $0x38] sm:$0xff] %vm318, %v317
      %s327 = smul.u32 8, %s14
      %p328 = scmp.lt.s32.totalorder %s327, 15
      %s329 = scalar_select %p328, %s327, 15
      %s330 = smul.addr %s329, 8
      %s331 = scalar_lea.vmem %s3, %s330
      // Predicated region
      $region33: #{tpu_custom_call.1} parent=31 // pred_check
        %p332 = pneg %p100
      $region34: #{tpu_custom_call.1} parent=31 // pred_check_branch
        %334 = sbr.rel (%p332) target = $region36
      $region35: #{tpu_custom_call.1} parent=31 // pred_region
        %s335 = smul.u32 8, %s14
      $region36: #{tpu_custom_call.1} parent=31 // pred_fallthru
        _
    $region32: #{tpu_custom_call.1} parent=5 // pred_fallthru
      _
    %p336 = scmp.le.s32.totalorder 2, %s9
    // Predicated region
    $region37: #{tpu_custom_call.1} parent=5 // pred_check
      %p337 = pneg %p336
    $region38: #{tpu_custom_call.1} parent=5 // pred_check_branch
      %339 = sbr.rel (%p337) target = $region40
    $region39: #{tpu_custom_call.1} parent=5 // pred_region
      %s340 = ssub.s32 %s9, 2
      // Predicated region
      $region41: #{tpu_custom_call.1} parent=39 // pred_check
        %p341 = pneg %p106
      $region42: #{tpu_custom_call.1} parent=39 // pred_check_branch
        %343 = sbr.rel (%p341) target = $region44
      $region43: #{tpu_custom_call.1} parent=39 // pred_region
        %s344 = smul.u32 8, %s15
        %p345 = scmp.lt.s32.totalorder %s344, 15
        %s346 = scalar_select %p345, %s344, 15
        %s347 = smul.addr %s346, 8
        %s348 = scalar_lea.vmem %s3, %s347
      $region44: #{tpu_custom_call.1} parent=39 // pred_fallthru
        _
    $region40: #{tpu_custom_call.1} parent=5 // pred_fallthru
      _
  $region6: #{tpu_custom_call.1} parent=0 // loop_footer
    %s13 = sadd.s32 1, %s9
  $region7: #{tpu_custom_call.1} parent=0 // loop_footer_branch
    %8 = sbr.rel target = $region3
  $region8: #{tpu_custom_call.1} parent=0 // loop_exit
    _

</llo_original>
